<compile_context>
chip_gen: v6e
topology: v6e:2x2x1
jax: 0.10.0
libtpu: 0.0.40
codegen_flags: <defaults>
</compile_context>

<pallas_src>
import jax
import jax.numpy as jnp
from jax.experimental import pallas as pl
from jax.experimental.pallas import tpu as pltpu

EPS = 1e-05


def _round_up(a, b):
    return (a + b - 1) // b * b


def _pick_hw_tile(hw128, cap):
    """Lane (last-dim) tile: multiple of 128, <= cap, ideally dividing hw128."""
    if hw128 <= cap:
        return hw128
    t = (cap // 128) * 128
    best = 128
    while t >= 128:
        if hw128 % t == 0:
            best = t
            break
        t -= 128
    # If the only divisors are tiny, prefer a big tile and pad instead.
    return best if best >= cap // 2 else (cap // 128) * 128


def _pick_o_tile(o_total, max_o):
    """Output-channel tile: full O if it fits the budget, else a multiple of 8
    (sublane granule), preferring divisors of O so O needs no padding."""
    if o_total <= max_o:
        return o_total
    cap8 = max(8, (max_o // 8) * 8)
    for t in range(cap8, 7, -8):
        if o_total % t == 0:
            return t
    return min(cap8, _round_up(o_total, 8))


def _bernoulli_kernel(x_ref, logp_ref, log1mp_ref, o_ref):
    # x_ref:      (1, C, HWt)   current batch element / HW tile
    # logp_ref:   (C, Ot, HWt)  log(prob) tile       (resident across N)
    # log1mp_ref: (C, Ot, HWt)  log(1 - prob) tile   (resident across N)
    # o_ref:      (1, Ot, HWt)  output tile
    x = x_ref[0]                                   # (C, HWt)
    valid = jnp.logical_not(jnp.isnan(x))          # NaN => marginalized pixel
    vf = valid.astype(jnp.float32)
    xc = jnp.where(valid, x, 0.0)                  # x with NaNs zeroed
    omx = vf - xc                                  # (1 - x) if valid, else 0

    c_total = x_ref.shape[1]
    # Unrolled accumulation over C: every term is a dense (Ot, HWt) VPU op; the
    # x rows are cheap (1, HWt) sublane-broadcasts. No XLU reduce, no
    # (Ot, C, HWt) temporary stored to / re-read from VMEM.
    acc = xc[0:1, :] * logp_ref[0] + omx[0:1, :] * log1mp_ref[0]
    for c in range(1, c_total):
        acc = acc + xc[c:c + 1, :] * logp_ref[c] + omx[c:c + 1, :] * log1mp_ref[c]
    o_ref[0] = acc


def spatial_bernoulli_forward(x, prob):
    """x: (N, C, H, W), prob: (O, C, H, W) -> (N, O, H, W) float32."""
    N, C, H, W = x.shape
    O = prob.shape[0]
    HW = H * W

    # ---- hoisted once-per-forward parameter work (clamp + logs) --------------
    # Tables are reordered to (C, O, HW) so the kernel's table blocks have
    # dense (o_tile, hw_tile) minor dims (C stays off the sublane axis).
    p = jnp.transpose(prob.reshape(O, C, HW), (1, 0, 2)).astype(jnp.float32)
    p = jnp.clip(p, EPS, 1.0 - EPS)
    p_ok = jnp.logical_not(jnp.isnan(p))               # NaN parameter =>
    log_p = jnp.where(p_ok, jnp.log(p), 0.0)           # zero contribution,
    log_1mp = jnp.where(p_ok, jnp.log(1.0 - p), 0.0)   # as in the reference.

    x_f = x.reshape(N, C, HW).astype(jnp.float32)

    # ---- generation-aware budgets ---------------------------------------------
    try:
        vmem_cap = int(pltpu.get_tpu_info().vmem_capacity_bytes)
    except Exception:
        vmem_cap = 64 * 1024 * 1024                    # conservative (v7x-sized)
    if vmem_cap >= 96 * 1024 * 1024:                   # v5e / v6e: 128 MiB VMEM
        lane_cap, table_budget = 4096, 8 * 1024 * 1024
    else:                                              # v7x: 64 MiB VMEM
        lane_cap, table_budget = 2048, 4 * 1024 * 1024

    # ---- tile selection --------------------------------------------------------
    hw128 = _round_up(HW, 128)
    hw_tile = _pick_hw_tile(hw128, lane_cap)
    hw_pad = _round_up(HW, hw_tile)

    max_o = max(1, table_budget // (C * hw_tile * 4))
    if O > max_o and max_o < 8:
        # Shrink the HW tile so at least 8 output channels fit per table tile.
        hw_tile = max(128, (table_budget // (C * 8 * 4)) // 128 * 128)
        hw_pad = _round_up(HW, hw_tile)
        max_o = max(1, table_budget // (C * hw_tile * 4))
    o_tile = _pick_o_tile(O, max_o)
    o_pad = _round_up(O, o_tile)

    # ---- padding: only when the shapes are not already aligned ----------------
    if hw_pad != HW:
        dhw = hw_pad - HW
        x_f = jnp.pad(x_f, ((0, 0), (0, 0), (0, dhw)))
        log_p = jnp.pad(log_p, ((0, 0), (0, 0), (0, dhw)))
        log_1mp = jnp.pad(log_1mp, ((0, 0), (0, 0), (0, dhw)))
    if o_pad != O:
        do = o_pad - O
        log_p = jnp.pad(log_p, ((0, 0), (0, do), (0, 0)))
        log_1mp = jnp.pad(log_1mp, ((0, 0), (0, do), (0, 0)))

    grid = (o_pad // o_tile, hw_pad // hw_tile, N)

    # ---- explicit VMEM budget (accounts for sublane padding; conservatively ---
    # sized for double-buffered tables in case single-buffering is unavailable).
    c_sub = _round_up(C, 8)
    o_sub = _round_up(o_tile, 8)
    table_tile = C * o_sub * hw_tile * 4
    vmem_est = (
        2 * 2 * table_tile                 # two log tables (worst case 2 bufs)
        + 2 * c_sub * hw_tile * 4          # x tile, double-buffered
        + 2 * o_sub * hw_tile * 4          # out tile, double-buffered
        + 2 * o_sub * hw_tile * 4          # accumulator / elementwise temporaries
    )
    vmem_limit = min(vmem_cap * 3 // 4,
                     max(32 * 1024 * 1024, int(vmem_est * 1.5)))

    def _call(table_pipeline_mode):
        tbl_kw = {} if table_pipeline_mode is None else {
            "pipeline_mode": table_pipeline_mode}

        def table_spec():
            return pl.BlockSpec((C, o_tile, hw_tile),
                                lambda o, hw, n: (0, o, hw), **tbl_kw)

        # Note: x is re-streamed once per O tile (its index map ignores `o`);
        # acceptable here since O usually fits in a single tile.
        return pl.pallas_call(
            _bernoulli_kernel,
            out_shape=jax.ShapeDtypeStruct((N, o_pad, hw_pad), jnp.float32),
            grid_spec=pltpu.PrefetchScalarGridSpec(
                num_scalar_prefetch=0,
                grid=grid,
                in_specs=[
                    pl.BlockSpec((1, C, hw_tile), lambda o, hw, n: (n, 0, hw)),
                    table_spec(),
                    table_spec(),
                ],
                out_specs=pl.BlockSpec((1, o_tile, hw_tile),
                                       lambda o, hw, n: (n, o, hw)),
            ),
            compiler_params=pltpu.CompilerParams(
                # No cross-iteration dependence on any axis -> all parallel
                # (lets v7x's two TensorCores split the grid; each core still
                # reuses its resident table tile across its share of N).
                dimension_semantics=("parallel", "parallel", "parallel"),
                vmem_limit_bytes=vmem_limit,
            ),
        )(x_f, log_p, log_1mp)

    # The tables' block index is constant along the innermost N axis, so a
    # single VMEM buffer suffices (one exposed table DMA per (o, hw) tile,
    # amortized over N). Fall back to default double-buffering if pl.Buffered
    # on pallas_call BlockSpecs is unsupported by the running JAX/Mosaic.
    try:
        out = _call(pl.Buffered(1))
    except Exception:
        out = _call(None)

    if o_pad != O or hw_pad != HW:
        out = out[:, :O, :HW]
    return out.reshape(N, O, H, W)


def _reference_forward(x, prob):
    """Pure-JAX reference mirroring the PyTorch module."""
    p = jnp.clip(prob, EPS, 1.0 - EPS)                      # (O, C, H, W)
    xu = x[:, None]                                         # (N, 1, C, H, W)
    lp = xu * jnp.log(p) + (1.0 - xu) * jnp.log(1.0 - p)    # (N, O, C, H, W)
    lp = jnp.where(jnp.isnan(lp), 0.0, lp)
    return jnp.sum(lp, axis=2)                              # (N, O, H, W)


if __name__ == "__main__":
    key = jax.random.PRNGKey(0)
    k_prob, k_x, k_nan = jax.random.split(key, 3)

    N, C, H, W = 2, 4, 16, 16
    out_channels = 8

    # Deterministic parameter init (torch.rand equivalent).
    prob = jax.random.uniform(k_prob, (out_channels, C, H, W), dtype=jnp.float32)

    # Binary inputs with some NaNs (marginalized pixels).
    x = jax.random.bernoulli(k_x, p=0.5, shape=(N, C, H, W)).astype(jnp.float32)
    nan_mask = jax.random.bernoulli(k_nan, p=0.1, shape=(N, C, H, W))
    x = jnp.where(nan_mask, jnp.nan, x)

    y = spatial_bernoulli_forward(x, prob)
    jax.block_until_ready(y)

    y_ref = _reference_forward(x, prob)
    assert y.shape == (N, out_channels, H, W)
    assert jnp.allclose(y, y_ref, atol=1e-5, rtol=1e-5), "mismatch vs reference"

    print("KERNEL_OK")
</pallas_src>

<mosaic_0001>
module attributes {stable_mosaic.version = 11 : i64} {
  func.func @_bernoulli_kernel(%arg0: i32, %arg1: i32, %arg2: i32, %arg3: memref<1x4x256xf32, #tpu.memory_space<vmem>>, %arg4: memref<4x8x256xf32, #tpu.memory_space<vmem>>, %arg5: memref<4x8x256xf32, #tpu.memory_space<vmem>>, %arg6: memref<1x8x256xf32, #tpu.memory_space<vmem>>) attributes {dimension_semantics = [#tpu.dimension_semantics<parallel>, #tpu.dimension_semantics<parallel>, #tpu.dimension_semantics<parallel>], iteration_bounds = array<i64: 1, 1, 2>, scalar_prefetch = 0 : i64, scratch_operands = 0 : i64, tpu.core_type = #tpu.core_type<tc>, window_params = [{transform_indices = @transform_0, window_bounds = array<i64: 1, 4, 256>}, {pipeline_mode = #tpu.pipeline_mode<synchronous>, transform_indices = @transform_1, window_bounds = array<i64: 4, 8, 256>}, {pipeline_mode = #tpu.pipeline_mode<synchronous>, transform_indices = @transform_2, window_bounds = array<i64: 4, 8, 256>}, {transform_indices = @transform_3, window_bounds = array<i64: 1, 8, 256>}]} {
    %c0 = arith.constant 0 : index
    %c0_0 = arith.constant 0 : index
    %c0_1 = arith.constant 0 : index
    %0 = vector.load %arg3[%c0, %c0_0, %c0_1] : memref<1x4x256xf32, #tpu.memory_space<vmem>>, vector<1x4x256xf32>
    %1 = vector.shape_cast %0 : vector<1x4x256xf32> to vector<4x256xf32>
    %2 = arith.cmpf one, %1, %1 : vector<4x256xf32>
    %cst = arith.constant dense<true> : vector<4x256xi1>
    %3 = arith.xori %2, %cst : vector<4x256xi1>
    %4 = arith.extui %3 : vector<4x256xi1> to vector<4x256xi32>
    %5 = arith.sitofp %4 : vector<4x256xi32> to vector<4x256xf32>
    %cst_2 = arith.constant 0.000000e+00 : f32
    %6 = vector.broadcast %cst_2 : f32 to vector<4x256xf32>
    %7 = arith.select %3, %1, %6 : vector<4x256xi1>, vector<4x256xf32>
    %8 = arith.subf %5, %7 : vector<4x256xf32>
    %9 = vector.extract_strided_slice %7 {offsets = [0, 0], sizes = [1, 256], strides = [1, 1]} : vector<4x256xf32> to vector<1x256xf32>
    %c0_3 = arith.constant 0 : index
    %c0_4 = arith.constant 0 : index
    %c0_5 = arith.constant 0 : index
    %10 = vector.load %arg4[%c0_3, %c0_4, %c0_5] : memref<4x8x256xf32, #tpu.memory_space<vmem>>, vector<1x8x256xf32>
    %11 = vector.shape_cast %10 : vector<1x8x256xf32> to vector<8x256xf32>
    %12 = vector.broadcast %9 : vector<1x256xf32> to vector<8x256xf32>
    %13 = arith.mulf %12, %11 : vector<8x256xf32>
    %14 = vector.extract_strided_slice %8 {offsets = [0, 0], sizes = [1, 256], strides = [1, 1]} : vector<4x256xf32> to vector<1x256xf32>
    %c0_6 = arith.constant 0 : index
    %c0_7 = arith.constant 0 : index
    %c0_8 = arith.constant 0 : index
    %15 = vector.load %arg5[%c0_6, %c0_7, %c0_8] : memref<4x8x256xf32, #tpu.memory_space<vmem>>, vector<1x8x256xf32>
    %16 = vector.shape_cast %15 : vector<1x8x256xf32> to vector<8x256xf32>
    %17 = vector.broadcast %14 : vector<1x256xf32> to vector<8x256xf32>
    %18 = arith.mulf %17, %16 : vector<8x256xf32>
    %19 = arith.addf %13, %18 : vector<8x256xf32>
    %20 = vector.extract_strided_slice %7 {offsets = [1, 0], sizes = [1, 256], strides = [1, 1]} : vector<4x256xf32> to vector<1x256xf32>
    %c1 = arith.constant 1 : index
    %c0_9 = arith.constant 0 : index
    %c0_10 = arith.constant 0 : index
    %21 = vector.load %arg4[%c1, %c0_9, %c0_10] : memref<4x8x256xf32, #tpu.memory_space<vmem>>, vector<1x8x256xf32>
    %22 = vector.shape_cast %21 : vector<1x8x256xf32> to vector<8x256xf32>
    %23 = vector.broadcast %20 : vector<1x256xf32> to vector<8x256xf32>
    %24 = arith.mulf %23, %22 : vector<8x256xf32>
    %25 = arith.addf %19, %24 : vector<8x256xf32>
    %26 = vector.extract_strided_slice %8 {offsets = [1, 0], sizes = [1, 256], strides = [1, 1]} : vector<4x256xf32> to vector<1x256xf32>
    %c1_11 = arith.constant 1 : index
    %c0_12 = arith.constant 0 : index
    %c0_13 = arith.constant 0 : index
    %27 = vector.load %arg5[%c1_11, %c0_12, %c0_13] : memref<4x8x256xf32, #tpu.memory_space<vmem>>, vector<1x8x256xf32>
    %28 = vector.shape_cast %27 : vector<1x8x256xf32> to vector<8x256xf32>
    %29 = vector.broadcast %26 : vector<1x256xf32> to vector<8x256xf32>
    %30 = arith.mulf %29, %28 : vector<8x256xf32>
    %31 = arith.addf %25, %30 : vector<8x256xf32>
    %32 = vector.extract_strided_slice %7 {offsets = [2, 0], sizes = [1, 256], strides = [1, 1]} : vector<4x256xf32> to vector<1x256xf32>
    %c2 = arith.constant 2 : index
    %c0_14 = arith.constant 0 : index
    %c0_15 = arith.constant 0 : index
    %33 = vector.load %arg4[%c2, %c0_14, %c0_15] : memref<4x8x256xf32, #tpu.memory_space<vmem>>, vector<1x8x256xf32>
    %34 = vector.shape_cast %33 : vector<1x8x256xf32> to vector<8x256xf32>
    %35 = vector.broadcast %32 : vector<1x256xf32> to vector<8x256xf32>
    %36 = arith.mulf %35, %34 : vector<8x256xf32>
    %37 = arith.addf %31, %36 : vector<8x256xf32>
    %38 = vector.extract_strided_slice %8 {offsets = [2, 0], sizes = [1, 256], strides = [1, 1]} : vector<4x256xf32> to vector<1x256xf32>
    %c2_16 = arith.constant 2 : index
    %c0_17 = arith.constant 0 : index
    %c0_18 = arith.constant 0 : index
    %39 = vector.load %arg5[%c2_16, %c0_17, %c0_18] : memref<4x8x256xf32, #tpu.memory_space<vmem>>, vector<1x8x256xf32>
    %40 = vector.shape_cast %39 : vector<1x8x256xf32> to vector<8x256xf32>
    %41 = vector.broadcast %38 : vector<1x256xf32> to vector<8x256xf32>
    %42 = arith.mulf %41, %40 : vector<8x256xf32>
    %43 = arith.addf %37, %42 : vector<8x256xf32>
    %44 = vector.extract_strided_slice %7 {offsets = [3, 0], sizes = [1, 256], strides = [1, 1]} : vector<4x256xf32> to vector<1x256xf32>
    %c3 = arith.constant 3 : index
    %c0_19 = arith.constant 0 : index
    %c0_20 = arith.constant 0 : index
    %45 = vector.load %arg4[%c3, %c0_19, %c0_20] : memref<4x8x256xf32, #tpu.memory_space<vmem>>, vector<1x8x256xf32>
    %46 = vector.shape_cast %45 : vector<1x8x256xf32> to vector<8x256xf32>
    %47 = vector.broadcast %44 : vector<1x256xf32> to vector<8x256xf32>
    %48 = arith.mulf %47, %46 : vector<8x256xf32>
    %49 = arith.addf %43, %48 : vector<8x256xf32>
    %50 = vector.extract_strided_slice %8 {offsets = [3, 0], sizes = [1, 256], strides = [1, 1]} : vector<4x256xf32> to vector<1x256xf32>
    %c3_21 = arith.constant 3 : index
    %c0_22 = arith.constant 0 : index
    %c0_23 = arith.constant 0 : index
    %51 = vector.load %arg5[%c3_21, %c0_22, %c0_23] : memref<4x8x256xf32, #tpu.memory_space<vmem>>, vector<1x8x256xf32>
    %52 = vector.shape_cast %51 : vector<1x8x256xf32> to vector<8x256xf32>
    %53 = vector.broadcast %50 : vector<1x256xf32> to vector<8x256xf32>
    %54 = arith.mulf %53, %52 : vector<8x256xf32>
    %55 = arith.addf %49, %54 : vector<8x256xf32>
    %c0_24 = arith.constant 0 : index
    %c0_25 = arith.constant 0 : index
    %c0_26 = arith.constant 0 : index
    %56 = vector.load %arg6[%c0_24, %c0_25, %c0_26] : memref<1x8x256xf32, #tpu.memory_space<vmem>>, vector<1x8x256xf32>
    %57 = vector.shape_cast %56 : vector<1x8x256xf32> to vector<8x256xf32>
    %58 = vector.shape_cast %55 : vector<8x256xf32> to vector<1x8x256xf32>
    tpu.vector_store %arg6[%c0_24, %c0_25, %c0_26], %58 {strides = array<i32>} : memref<1x8x256xf32, #tpu.memory_space<vmem>>, vector<1x8x256xf32>,
    return
  }
  func.func @transform_0(%arg0: i32, %arg1: i32, %arg2: i32) -> (i32, i32, i32) {
    %c0_i32 = arith.constant 0 : i32
    %c0_i32_0 = arith.constant 0 : i32
    return %arg2, %c0_i32, %arg1 : i32, i32, i32
  }
  func.func @transform_1(%arg0: i32, %arg1: i32, %arg2: i32) -> (i32, i32, i32) {
    %c0_i32 = arith.constant 0 : i32
    %c0_i32_0 = arith.constant 0 : i32
    return %c0_i32, %arg0, %arg1 : i32, i32, i32
  }
  func.func @transform_2(%arg0: i32, %arg1: i32, %arg2: i32) -> (i32, i32, i32) {
    %c0_i32 = arith.constant 0 : i32
    %c0_i32_0 = arith.constant 0 : i32
    return %c0_i32, %arg0, %arg1 : i32, i32, i32
  }
  func.func @transform_3(%arg0: i32, %arg1: i32, %arg2: i32) -> (i32, i32, i32) {
    %c0_i32 = arith.constant 0 : i32
    return %arg2, %arg0, %arg1 : i32, i32, i32
  }
}

module attributes {stable_mosaic.version = 11 : i64} {
  func.func @_bernoulli_kernel(%arg0: i32, %arg1: i32, %arg2: i32, %arg3: memref<1x4x256xf32, #tpu.memory_space<vmem>>, %arg4: memref<4x8x256xf32, #tpu.memory_space<vmem>>, %arg5: memref<4x8x256xf32, #tpu.memory_space<vmem>>, %arg6: memref<1x8x256xf32, #tpu.memory_space<vmem>>) attributes {dimension_semantics = [#tpu.dimension_semantics<parallel>, #tpu.dimension_semantics<parallel>, #tpu.dimension_semantics<parallel>], iteration_bounds = array<i64: 1, 1, 2>, scalar_prefetch = 0 : i64, scratch_operands = 0 : i64, tpu.core_type = #tpu.core_type<tc>, window_params = [{transform_indices = @transform_0, window_bounds = array<i64: 1, 4, 256>}, {transform_indices = @transform_1, window_bounds = array<i64: 4, 8, 256>}, {transform_indices = @transform_2, window_bounds = array<i64: 4, 8, 256>}, {transform_indices = @transform_3, window_bounds = array<i64: 1, 8, 256>}]} {
    %c0 = arith.constant 0 : index
    %c0_0 = arith.constant 0 : index
    %c0_1 = arith.constant 0 : index
    %0 = vector.load %arg3[%c0, %c0_0, %c0_1] : memref<1x4x256xf32, #tpu.memory_space<vmem>>, vector<1x4x256xf32>
    %1 = vector.shape_cast %0 : vector<1x4x256xf32> to vector<4x256xf32>
    %2 = arith.cmpf one, %1, %1 : vector<4x256xf32>
    %cst = arith.constant dense<true> : vector<4x256xi1>
    %3 = arith.xori %2, %cst : vector<4x256xi1>
    %4 = arith.extui %3 : vector<4x256xi1> to vector<4x256xi32>
    %5 = arith.sitofp %4 : vector<4x256xi32> to vector<4x256xf32>
    %cst_2 = arith.constant 0.000000e+00 : f32
    %6 = vector.broadcast %cst_2 : f32 to vector<4x256xf32>
    %7 = arith.select %3, %1, %6 : vector<4x256xi1>, vector<4x256xf32>
    %8 = arith.subf %5, %7 : vector<4x256xf32>
    %9 = vector.extract_strided_slice %7 {offsets = [0, 0], sizes = [1, 256], strides = [1, 1]} : vector<4x256xf32> to vector<1x256xf32>
    %c0_3 = arith.constant 0 : index
    %c0_4 = arith.constant 0 : index
    %c0_5 = arith.constant 0 : index
    %10 = vector.load %arg4[%c0_3, %c0_4, %c0_5] : memref<4x8x256xf32, #tpu.memory_space<vmem>>, vector<1x8x256xf32>
    %11 = vector.shape_cast %10 : vector<1x8x256xf32> to vector<8x256xf32>
    %12 = vector.broadcast %9 : vector<1x256xf32> to vector<8x256xf32>
    %13 = arith.mulf %12, %11 : vector<8x256xf32>
    %14 = vector.extract_strided_slice %8 {offsets = [0, 0], sizes = [1, 256], strides = [1, 1]} : vector<4x256xf32> to vector<1x256xf32>
    %c0_6 = arith.constant 0 : index
    %c0_7 = arith.constant 0 : index
    %c0_8 = arith.constant 0 : index
    %15 = vector.load %arg5[%c0_6, %c0_7, %c0_8] : memref<4x8x256xf32, #tpu.memory_space<vmem>>, vector<1x8x256xf32>
    %16 = vector.shape_cast %15 : vector<1x8x256xf32> to vector<8x256xf32>
    %17 = vector.broadcast %14 : vector<1x256xf32> to vector<8x256xf32>
    %18 = arith.mulf %17, %16 : vector<8x256xf32>
    %19 = arith.addf %13, %18 : vector<8x256xf32>
    %20 = vector.extract_strided_slice %7 {offsets = [1, 0], sizes = [1, 256], strides = [1, 1]} : vector<4x256xf32> to vector<1x256xf32>
    %c1 = arith.constant 1 : index
    %c0_9 = arith.constant 0 : index
    %c0_10 = arith.constant 0 : index
    %21 = vector.load %arg4[%c1, %c0_9, %c0_10] : memref<4x8x256xf32, #tpu.memory_space<vmem>>, vector<1x8x256xf32>
    %22 = vector.shape_cast %21 : vector<1x8x256xf32> to vector<8x256xf32>
    %23 = vector.broadcast %20 : vector<1x256xf32> to vector<8x256xf32>
    %24 = arith.mulf %23, %22 : vector<8x256xf32>
    %25 = arith.addf %19, %24 : vector<8x256xf32>
    %26 = vector.extract_strided_slice %8 {offsets = [1, 0], sizes = [1, 256], strides = [1, 1]} : vector<4x256xf32> to vector<1x256xf32>
    %c1_11 = arith.constant 1 : index
    %c0_12 = arith.constant 0 : index
    %c0_13 = arith.constant 0 : index
    %27 = vector.load %arg5[%c1_11, %c0_12, %c0_13] : memref<4x8x256xf32, #tpu.memory_space<vmem>>, vector<1x8x256xf32>
    %28 = vector.shape_cast %27 : vector<1x8x256xf32> to vector<8x256xf32>
    %29 = vector.broadcast %26 : vector<1x256xf32> to vector<8x256xf32>
    %30 = arith.mulf %29, %28 : vector<8x256xf32>
    %31 = arith.addf %25, %30 : vector<8x256xf32>
    %32 = vector.extract_strided_slice %7 {offsets = [2, 0], sizes = [1, 256], strides = [1, 1]} : vector<4x256xf32> to vector<1x256xf32>
    %c2 = arith.constant 2 : index
    %c0_14 = arith.constant 0 : index
    %c0_15 = arith.constant 0 : index
    %33 = vector.load %arg4[%c2, %c0_14, %c0_15] : memref<4x8x256xf32, #tpu.memory_space<vmem>>, vector<1x8x256xf32>
    %34 = vector.shape_cast %33 : vector<1x8x256xf32> to vector<8x256xf32>
    %35 = vector.broadcast %32 : vector<1x256xf32> to vector<8x256xf32>
    %36 = arith.mulf %35, %34 : vector<8x256xf32>
    %37 = arith.addf %31, %36 : vector<8x256xf32>
    %38 = vector.extract_strided_slice %8 {offsets = [2, 0], sizes = [1, 256], strides = [1, 1]} : vector<4x256xf32> to vector<1x256xf32>
    %c2_16 = arith.constant 2 : index
    %c0_17 = arith.constant 0 : index
    %c0_18 = arith.constant 0 : index
    %39 = vector.load %arg5[%c2_16, %c0_17, %c0_18] : memref<4x8x256xf32, #tpu.memory_space<vmem>>, vector<1x8x256xf32>
    %40 = vector.shape_cast %39 : vector<1x8x256xf32> to vector<8x256xf32>
    %41 = vector.broadcast %38 : vector<1x256xf32> to vector<8x256xf32>
    %42 = arith.mulf %41, %40 : vector<8x256xf32>
    %43 = arith.addf %37, %42 : vector<8x256xf32>
    %44 = vector.extract_strided_slice %7 {offsets = [3, 0], sizes = [1, 256], strides = [1, 1]} : vector<4x256xf32> to vector<1x256xf32>
    %c3 = arith.constant 3 : index
    %c0_19 = arith.constant 0 : index
    %c0_20 = arith.constant 0 : index
    %45 = vector.load %arg4[%c3, %c0_19, %c0_20] : memref<4x8x256xf32, #tpu.memory_space<vmem>>, vector<1x8x256xf32>
    %46 = vector.shape_cast %45 : vector<1x8x256xf32> to vector<8x256xf32>
    %47 = vector.broadcast %44 : vector<1x256xf32> to vector<8x256xf32>
    %48 = arith.mulf %47, %46 : vector<8x256xf32>
    %49 = arith.addf %43, %48 : vector<8x256xf32>
    %50 = vector.extract_strided_slice %8 {offsets = [3, 0], sizes = [1, 256], strides = [1, 1]} : vector<4x256xf32> to vector<1x256xf32>
    %c3_21 = arith.constant 3 : index
    %c0_22 = arith.constant 0 : index
    %c0_23 = arith.constant 0 : index
    %51 = vector.load %arg5[%c3_21, %c0_22, %c0_23] : memref<4x8x256xf32, #tpu.memory_space<vmem>>, vector<1x8x256xf32>
    %52 = vector.shape_cast %51 : vector<1x8x256xf32> to vector<8x256xf32>
    %53 = vector.broadcast %50 : vector<1x256xf32> to vector<8x256xf32>
    %54 = arith.mulf %53, %52 : vector<8x256xf32>
    %55 = arith.addf %49, %54 : vector<8x256xf32>
    %c0_24 = arith.constant 0 : index
    %c0_25 = arith.constant 0 : index
    %c0_26 = arith.constant 0 : index
    %56 = vector.load %arg6[%c0_24, %c0_25, %c0_26] : memref<1x8x256xf32, #tpu.memory_space<vmem>>, vector<1x8x256xf32>
    %57 = vector.shape_cast %56 : vector<1x8x256xf32> to vector<8x256xf32>
    %58 = vector.shape_cast %55 : vector<8x256xf32> to vector<1x8x256xf32>
    tpu.vector_store %arg6[%c0_24, %c0_25, %c0_26], %58 {strides = array<i32>} : memref<1x8x256xf32, #tpu.memory_space<vmem>>, vector<1x8x256xf32>,
    return
  }
  func.func @transform_0(%arg0: i32, %arg1: i32, %arg2: i32) -> (i32, i32, i32) {
    %c0_i32 = arith.constant 0 : i32
    %c0_i32_0 = arith.constant 0 : i32
    return %arg2, %c0_i32, %arg1 : i32, i32, i32
  }
  func.func @transform_1(%arg0: i32, %arg1: i32, %arg2: i32) -> (i32, i32, i32) {
    %c0_i32 = arith.constant 0 : i32
    %c0_i32_0 = arith.constant 0 : i32
    return %c0_i32, %arg0, %arg1 : i32, i32, i32
  }
  func.func @transform_2(%arg0: i32, %arg1: i32, %arg2: i32) -> (i32, i32, i32) {
    %c0_i32 = arith.constant 0 : i32
    %c0_i32_0 = arith.constant 0 : i32
    return %c0_i32, %arg0, %arg1 : i32, i32, i32
  }
  func.func @transform_3(%arg0: i32, %arg1: i32, %arg2: i32) -> (i32, i32, i32) {
    %c0_i32 = arith.constant 0 : i32
    return %arg2, %arg0, %arg1 : i32, i32, i32
  }
}

</mosaic_0001>

<llo_original>
// kernel: tpu_custom_call.1
$region0: #{tpu_custom_call.1}
  #allocation0 [shape = 'u32[]', space=smem, size = 0x4, offset = 0x4, fixed_abs, tag = 'smem constant byte address 0x4 - core index']
  #allocation1 [shape = 'u32[144,128]{1,0:T(1,128)}', space=vmem, size = 0x12000, scoped, tag = 'internal scratch']
  %s0 = inlined_call_operand.hbm [shape: f32[2,4,256], index: 0, kind: input, shape index: {}]
  %s1 = inlined_call_operand.hbm [shape: f32[4,8,256], index: 1, kind: input, shape index: {}]
  %s2 = inlined_call_operand.hbm [shape: f32[4,8,256], index: 2, kind: input, shape index: {}]
  %s3 = inlined_call_operand.hbm [shape: f32[2,8,256], index: 3, kind: output, shape index: {}]
  %s4 = sld [smem:[#allocation0]]
  $region57: #{tpu_custom_call.1} parent=0
    _
  %s6 = ssub.s32 1, %s4
  %s7 = scalar_select 0, %s6, %s4
  $region1: #{tpu_custom_call.1} parent=0
    #allocation2 [shape = 'u8[8192]{0}', space=vmem, size = 0x2000, scoped, tag = 'input window, operand 0']
    #allocation3 [shape = 's32[2]{0}', space=sflag, size = 0x8, scoped, tag = 'scoped memory for tpu_custom_call.1']
    #allocation4 [shape = 's32[2]{0}', space=sflag, size = 0x8, scoped, tag = 'scoped memory for tpu_custom_call.1']
    #allocation5 [shape = 'u8[32768]{0}', space=vmem, size = 0x8000, scoped, tag = 'input window, operand 1, single buffered']
    #allocation6 [shape = 's32[1]{0}', space=sflag, size = 0x4, scoped, tag = 'scoped memory for tpu_custom_call.1']
    #allocation7 [shape = 'u8[32768]{0}', space=vmem, size = 0x8000, scoped, tag = 'input window, operand 2, single buffered']
    #allocation8 [shape = 'u8[16384]{0}', space=vmem, size = 0x4000, scoped, tag = 'output window, operand 0']
    %8 = vsyncpa [#allocation3], 0
    %s9 = scalar_lea.sflag [#allocation3], 1
    %10 = vsyncpa %s9, 0
    %11 = vsyncpa [#allocation6], 0
    %12 = vsyncpa [#allocation4], 0
    %s13 = scalar_lea.sflag [#allocation4], 1
    %14 = vsyncpa %s13, 0
    loop: start=0, step=1, limit=4
    $region2: #{tpu_custom_call.1} parent=1 // loop_pre_header
      _
    $region3: #{tpu_custom_call.1} parent=1 // loop_header
      %s16 = sphi 0, %s20
      %p17 = scmp.ge.s32.totalorder %s16, 4
      %s23 = sphi 0, %s42
      %s24 = sphi 0, %s38
      %s25 = sphi 0, %s34
      %s26 = sphi 0, %s23
      %s27 = sphi 0, %s24
      %s28 = sphi 0, %s25
      %s29 = sphi 0, %s26
      %s30 = sphi 0, %s27
      %s31 = sphi 0, %s28
      %s47 = sphi 0, %s49
      %s50 = sphi 0, %s47
      %s51 = sphi 0, %s50
      %s67 = sphi 0, %s51
      %s75 = sphi 0, %s77
      %s78 = sphi 0, %s75
      %s79 = sphi 0, %s78
      %s95 = sphi 0, %s79
      %s103 = sphi 0, %s105
      %s106 = sphi 0, %s103
      %s107 = sphi 0, %s106
      %s123 = sphi 0, %s107
      %s133 = sphi 0, %s135
      %s136 = sphi 0, %s133
      %s137 = sphi 0, %s136
      %s153 = sphi 0, %s137
    $region4: #{tpu_custom_call.1} parent=1 // loop_header_branch
      %19 = sbr.rel (%p17) target = $region8
    $region5: #{tpu_custom_call.1} parent=1 // loop_body
      %s21 = ssub.s32 %s16, 1
      %s22 = ssub.s32 %s16, 2
      %s32 = sadd.s32 1, %s25
      %p33 = scmp.ge.s32.totalorder %s32, 2
      %s34 = scalar_select %p33, 0, %s32
      %s35 = sadd.s32 1, %s24
      %s36 = scalar_select %p33, %s35, %s24
      %p37 = scmp.ge.s32.totalorder %s36, 1
      %s38 = scalar_select %p37, 0, %s36
      %s39 = sadd.s32 1, %s23
      %s40 = scalar_select %p37, %s39, %s23
      %p41 = scmp.ge.s32.totalorder %s40, 1
      %s42 = scalar_select %p41, 0, %s40
      %s43 = ssub.s32 %s25, %s34
      %s44 = ssub.s32 %s24, %s38
      %s45 = sor.u32 %s43, %s44
      %p46 = scmp.eq.s32.totalorder %s45, 0
      %s48 = sadd.s32 %s47, 1
      %s49 = scalar_select %p46, %s47, %s48
      %p52 = pneg %p46
      %p53 = scmp.eq.s32.totalorder %s16, 1
      %p54 = por %p52, %p53
      %p55 = scmp.ne.s32.totalorder %s47, %s50
      %p56 = scmp.eq.s32.totalorder %s16, 0
      %p57 = por %p55, %p56
      %p58 = scmp.ne.s32.totalorder %s47, %s50
      %p59 = scmp.eq.s32.totalorder %s21, 1
      %p60 = por %p58, %p59
      %p61 = scmp.ne.s32.totalorder %s50, %s51
      %p62 = scmp.eq.s32.totalorder %s21, 0
      %p63 = por %p61, %p62
      %p64 = scmp.ne.s32.totalorder %s50, %s51
      %p65 = scmp.eq.s32.totalorder %s22, 1
      %p66 = por %p64, %p65
      %p68 = scmp.ne.s32.totalorder %s51, %s67
      %p69 = scmp.eq.s32.totalorder %s22, 0
      %p70 = por %p68, %p69
      %s71 = ssub.s32 %s23, %s42
      %s72 = ssub.s32 %s24, %s38
      %s73 = sor.u32 %s71, %s72
      %p74 = scmp.eq.s32.totalorder %s73, 0
      %s76 = sadd.s32 %s75, 1
      %s77 = scalar_select %p74, %s75, %s76
      %p80 = pneg %p74
      %p81 = scmp.eq.s32.totalorder %s16, 1
      %p82 = por %p80, %p81
      %p83 = scmp.ne.s32.totalorder %s75, %s78
      %p84 = scmp.eq.s32.totalorder %s16, 0
      %p85 = por %p83, %p84
      %p86 = scmp.ne.s32.totalorder %s75, %s78
      %p87 = scmp.eq.s32.totalorder %s21, 1
      %p88 = por %p86, %p87
      %p89 = scmp.ne.s32.totalorder %s78, %s79
      %p90 = scmp.eq.s32.totalorder %s21, 0
      %p91 = por %p89, %p90
      %p92 = scmp.ne.s32.totalorder %s78, %s79
      %p93 = scmp.eq.s32.totalorder %s22, 1
      %p94 = por %p92, %p93
      %p96 = scmp.ne.s32.totalorder %s79, %s95
      %p97 = scmp.eq.s32.totalorder %s22, 0
      %p98 = por %p96, %p97
      %s99 = ssub.s32 %s23, %s42
      %s100 = ssub.s32 %s24, %s38
      %s101 = sor.u32 %s99, %s100
      %p102 = scmp.eq.s32.totalorder %s101, 0
      %s104 = sadd.s32 %s103, 1
      %s105 = scalar_select %p102, %s103, %s104
      %p108 = pneg %p102
      %p109 = scmp.eq.s32.totalorder %s16, 1
      %p110 = por %p108, %p109
      %p111 = scmp.ne.s32.totalorder %s103, %s106
      %p112 = scmp.eq.s32.totalorder %s16, 0
      %p113 = por %p111, %p112
      %p114 = scmp.ne.s32.totalorder %s103, %s106
      %p115 = scmp.eq.s32.totalorder %s21, 1
      %p116 = por %p114, %p115
      %p117 = scmp.ne.s32.totalorder %s106, %s107
      %p118 = scmp.eq.s32.totalorder %s21, 0
      %p119 = por %p117, %p118
      %p120 = scmp.ne.s32.totalorder %s106, %s107
      %p121 = scmp.eq.s32.totalorder %s22, 1
      %p122 = por %p120, %p121
      %p124 = scmp.ne.s32.totalorder %s107, %s123
      %p125 = scmp.eq.s32.totalorder %s22, 0
      %p126 = por %p124, %p125
      %s127 = ssub.s32 %s25, %s34
      %s128 = ssub.s32 %s23, %s42
      %s129 = sor.u32 %s127, %s128
      %s130 = ssub.s32 %s24, %s38
      %s131 = sor.u32 %s129, %s130
      %p132 = scmp.eq.s32.totalorder %s131, 0
      %s134 = sadd.s32 %s133, 1
      %s135 = scalar_select %p132, %s133, %s134
      %p138 = pneg %p132
      %p139 = scmp.eq.s32.totalorder %s16, 1
      %p140 = por %p138, %p139
      %p141 = scmp.ne.s32.totalorder %s133, %s136
      %p142 = scmp.eq.s32.totalorder %s16, 0
      %p143 = por %p141, %p142
      %p144 = scmp.ne.s32.totalorder %s133, %s136
      %p145 = scmp.eq.s32.totalorder %s21, 1
      %p146 = por %p144, %p145
      %p147 = scmp.ne.s32.totalorder %s136, %s137
      %p148 = scmp.eq.s32.totalorder %s21, 0
      %p149 = por %p147, %p148
      %p150 = scmp.ne.s32.totalorder %s136, %s137
      %p151 = scmp.eq.s32.totalorder %s22, 1
      %p152 = por %p150, %p151
      %p154 = scmp.ne.s32.totalorder %s137, %s153
      %p155 = scmp.eq.s32.totalorder %s22, 0
      %p156 = por %p154, %p155
      %p157 = scmp.le.s32.totalorder 1, %s16
      %p158 = scmp.lt.s32.totalorder %s16, 3
      %p159 = pnand %p157, %p158
      %p160 = pneg %p159
      // Predicated region
      $region9: #{tpu_custom_call.1} parent=5 // pred_check
        _
      $region10: #{tpu_custom_call.1} parent=5 // pred_check_branch
        %162 = sbr.rel (%p159) target = $region12
      $region11: #{tpu_custom_call.1} parent=5 // pred_region
        %s163 = ssub.s32 %s16, 1
        // Predicated region
        $region13: #{tpu_custom_call.1} parent=11 // pred_check
          %p164 = pneg %p91
        $region14: #{tpu_custom_call.1} parent=11 // pred_check_branch
          %166 = sbr.rel (%p164) target = $region16
        $region15: #{tpu_custom_call.1} parent=11 // pred_region
          %s167 = smul.u32 2, %s27
          %s169 = ssub.s32 1024, 1024
          %170 = vsyncadd [#allocation6], %s169
          %s171 = smul.addr %s26, 2
          %s172 = sadd.s32 %s167, %s171
          %s173 = smul.addr %s172, 128
          %s174 = scalar_lea.hbm %s1, %s173
          %s175 = sshll.u32 [#allocation5], 4
          %s176 = int_to_ptr.vmem [resolvable:$true] %s175
          %181 = dma.hbm_to_vmem [thread:$0]  %s174, 1024, %s176, [#allocation6], 256, 256, 16
        $region16: #{tpu_custom_call.1} parent=11 // pred_fallthru
          _
        // Predicated region
        $region17: #{tpu_custom_call.1} parent=11 // pred_check
          %p182 = pneg %p119
        $region18: #{tpu_custom_call.1} parent=11 // pred_check_branch
          %184 = sbr.rel (%p182) target = $region20
        $region19: #{tpu_custom_call.1} parent=11 // pred_region
          %s185 = smul.u32 2, %s27
          %s187 = ssub.s32 1024, 1024
          %188 = vsyncadd [#allocation6], %s187
          %s189 = smul.addr %s26, 2
          %s190 = sadd.s32 %s185, %s189
          %s191 = smul.addr %s190, 128
          %s192 = scalar_lea.hbm %s2, %s191
          %s193 = sshll.u32 [#allocation7], 4
          %s194 = int_to_ptr.vmem [resolvable:$true] %s193
          %199 = dma.hbm_to_vmem [thread:$0]  %s192, 1024, %s194, [#allocation6], 256, 256, 16
        $region20: #{tpu_custom_call.1} parent=11 // pred_fallthru
          _
      $region12: #{tpu_custom_call.1} parent=5 // pred_fallthru
        _
      %p200 = scmp.lt.s32.totalorder %s16, 2
      // Predicated region
      $region21: #{tpu_custom_call.1} parent=5 // pred_check
        %p201 = pneg %p200
      $region22: #{tpu_custom_call.1} parent=5 // pred_check_branch
        %203 = sbr.rel (%p201) target = $region24
      $region23: #{tpu_custom_call.1} parent=5 // pred_region
        // Predicated region
        $region25: #{tpu_custom_call.1} parent=23 // pred_check
          %p204 = pneg %p57
        $region26: #{tpu_custom_call.1} parent=23 // pred_check_branch
          %206 = sbr.rel (%p204) target = $region28
        $region27: #{tpu_custom_call.1} parent=23 // pred_region
          %s207 = sand.u32 %s47, 1
          %s208 = scalar_lea.sflag [#allocation3], %s207
          %s209 = sand.u32 %s47, 1
          %s210 = smul.addr %s209, 8
          %s211 = scalar_lea.vmem [#allocation2], %s210
          %s212 = smul.u32 2, %s24
          %s214 = ssub.s32 128, 128
          %215 = vsyncadd %s208, %s214
          %s216 = smul.addr %s25, 2
          %s217 = sadd.s32 %s212, %s216
          %s218 = smul.addr %s217, 64
          %s219 = scalar_lea.hbm %s0, %s218
          %s221 = sshll.u32 %s211, 4
          %s222 = int_to_ptr.vmem [resolvable:$true] %s221
          %224 = dma.hbm_to_vmem [thread:$0]  %s219, 128, %s222, %s208
        $region28: #{tpu_custom_call.1} parent=23 // pred_fallthru
          _
      $region24: #{tpu_custom_call.1} parent=5 // pred_fallthru
        _
      %p225 = scmp.le.s32.totalorder 1, %s16
      %p226 = scmp.lt.s32.totalorder %s16, 3
      %p227 = pnand %p225, %p226
      %p228 = pneg %p227
      // Predicated region
      $region29: #{tpu_custom_call.1} parent=5 // pred_check
        _
      $region30: #{tpu_custom_call.1} parent=5 // pred_check_branch
        %230 = sbr.rel (%p227) target = $region32
      $region31: #{tpu_custom_call.1} parent=5 // pred_region
        %s231 = ssub.s32 %s16, 1
        %s232 = sand.u32 %s50, 1
        %s233 = scalar_lea.sflag [#allocation3], %s232
        %s234 = sand.u32 %s50, 1
        %s235 = smul.addr %s234, 8
        %s236 = scalar_lea.vmem [#allocation2], %s235
        // Predicated region
        $region33: #{tpu_custom_call.1} parent=31 // pred_check
          %p237 = pneg %p63
        $region34: #{tpu_custom_call.1} parent=31 // pred_check_branch
          %239 = sbr.rel (%p237) target = $region36
        $region35: #{tpu_custom_call.1} parent=31 // pred_region
          %240 = dma.done %s233, 128
        $region36: #{tpu_custom_call.1} parent=31 // pred_fallthru
          _
        // Predicated region
        $region37: #{tpu_custom_call.1} parent=31 // pred_check
          %p241 = pneg %p91
        $region38: #{tpu_custom_call.1} parent=31 // pred_check_branch
          %243 = sbr.rel (%p241) target = $region40
        $region39: #{tpu_custom_call.1} parent=31 // pred_region
          %244 = dma.done [#allocation6], 1024
        $region40: #{tpu_custom_call.1} parent=31 // pred_fallthru
          _
        // Predicated region
        $region41: #{tpu_custom_call.1} parent=31 // pred_check
          %p245 = pneg %p119
        $region42: #{tpu_custom_call.1} parent=31 // pred_check_branch
          %247 = sbr.rel (%p245) target = $region44
        $region43: #{tpu_custom_call.1} parent=31 // pred_region
          %248 = dma.done [#allocation6], 1024
        $region44: #{tpu_custom_call.1} parent=31 // pred_fallthru
          _
        %s249 = sand.u32 %s50, 1
        %s250 = scalar_lea.sflag [#allocation3], %s249
        %s251 = sand.u32 %s50, 1
        %s252 = smul.addr %s251, 8
        %s253 = scalar_lea.vmem [#allocation2], %s252
        %p254 = pneg %p63
        %p255 = pneg %p60
        %p256 = pneg %p91
        %p257 = pneg %p88
        %p258 = pneg %p119
        %p259 = pneg %p116
        %p260 = pneg %p149
        %p261 = pneg %p146
        %s262 = sand.u32 %s136, 1
        %s263 = scalar_lea.sflag [#allocation4], %s262
        %s264 = sand.u32 %s136, 1
        %s265 = smul.addr %s264, 16
        %s266 = scalar_lea.vmem [#allocation8], %s265
        %s267 = smul.u32 2, %s27
        %s268 = smul.u32 2, %s27
        %s269 = smul.u32 2, %s27
        %s270 = smul.u32 2, %s27
        %v271 = vld [vmem:[%s236] sm:$0xff]
        %vm272 = vcmp.ne.f32.partialorder %v271, %v271
        %vm273 = vmxor %vm272, 1
        %v274 = vsel %vm273, 1, 0
        %v275 = vcvt.s32.f32 %v274
        %v276 = vsel %vm273, %v271, 0.0
        %v277 = vsub.f32 %v275, %v276
        %v278 = vld [vmem:[#allocation5] sm:$0xff]
        %v279 = vld [vmem:[#allocation5 + $0x8] sm:$0xff]
        %v281 = vlaneseq
        %v282 = vshrl.u32 %v281, 7
        %v283 = vsub.s32 0, %v282
        %v284 = vrot.slane %v276, %v283
        %v285 = vlaneseq
        %v286 = vshrl.u32 %v285, 7
        %v287 = vsub.s32 4, %v286
        %v288 = vrot.slane %v276, %v287
        %v291 = vlaneseq
        %v292 = vshrl.u32 %v291, 7
        %v293 = vsub.s32 0, %v292
        %v294 = vrot.slane %v284, %v293
        %v295 = vlaneseq
        %v296 = vshrl.u32 %v295, 7
        %v297 = vsub.s32 0, %v296
        %v298 = vrot.slane %v288, %v297
        %v299 = vmul.f32 %v294, %v278
        %v300 = vmul.f32 %v298, %v279
        %v301 = vld [vmem:[#allocation7] sm:$0xff]
        %v302 = vld [vmem:[#allocation7 + $0x8] sm:$0xff]
        %v304 = vlaneseq
        %v305 = vshrl.u32 %v304, 7
        %v306 = vsub.s32 0, %v305
        %v307 = vrot.slane %v277, %v306
        %v308 = vlaneseq
        %v309 = vshrl.u32 %v308, 7
        %v310 = vsub.s32 4, %v309
        %v311 = vrot.slane %v277, %v310
        %v314 = vlaneseq
        %v315 = vshrl.u32 %v314, 7
        %v316 = vsub.s32 0, %v315
        %v317 = vrot.slane %v307, %v316
        %v318 = vlaneseq
        %v319 = vshrl.u32 %v318, 7
        %v320 = vsub.s32 0, %v319
        %v321 = vrot.slane %v311, %v320
        %v322 = vmul.f32 %v317, %v301
        %v323 = vmul.f32 %v321, %v302
        %v324 = vadd.f32 %v299, %v322
        %v325 = vadd.f32 %v300, %v323
        %s326 = scalar_lea.vmem [#allocation5], 16
        %v327 = vld [vmem:[%s326] sm:$0xff]
        %v328 = vld [vmem:[%s326 + $0x8] sm:$0xff]
        %v329 = vlaneseq
        %v330 = vshrl.u32 %v329, 7
        %v331 = vsub.s32 1, %v330
        %v332 = vrot.slane %v276, %v331
        %v333 = vlaneseq
        %v334 = vshrl.u32 %v333, 7
        %v335 = vsub.s32 5, %v334
        %v336 = vrot.slane %v276, %v335
        %v339 = vlaneseq
        %v340 = vshrl.u32 %v339, 7
        %v341 = vsub.s32 1, %v340
        %v342 = vrot.slane %v332, %v341
        %v343 = vlaneseq
        %v344 = vshrl.u32 %v343, 7
        %v345 = vsub.s32 1, %v344
        %v346 = vrot.slane %v336, %v345
        %v347 = vmul.f32 %v342, %v327
        %v348 = vmul.f32 %v346, %v328
        %v349 = vadd.f32 %v324, %v347
        %v350 = vadd.f32 %v325, %v348
        %s351 = scalar_lea.vmem [#allocation7], 16
        %v352 = vld [vmem:[%s351] sm:$0xff]
        %v353 = vld [vmem:[%s351 + $0x8] sm:$0xff]
        %v354 = vlaneseq
        %v355 = vshrl.u32 %v354, 7
        %v356 = vsub.s32 1, %v355
        %v357 = vrot.slane %v277, %v356
        %v358 = vlaneseq
        %v359 = vshrl.u32 %v358, 7
        %v360 = vsub.s32 5, %v359
        %v361 = vrot.slane %v277, %v360
        %v364 = vlaneseq
        %v365 = vshrl.u32 %v364, 7
        %v366 = vsub.s32 1, %v365
        %v367 = vrot.slane %v357, %v366
        %v368 = vlaneseq
        %v369 = vshrl.u32 %v368, 7
        %v370 = vsub.s32 1, %v369
        %v371 = vrot.slane %v361, %v370
        %v372 = vmul.f32 %v367, %v352
        %v373 = vmul.f32 %v371, %v353
        %v374 = vadd.f32 %v349, %v372
        %v375 = vadd.f32 %v350, %v373
        %s376 = scalar_lea.vmem [#allocation5], 32
        %v377 = vld [vmem:[%s376] sm:$0xff]
        %v378 = vld [vmem:[%s376 + $0x8] sm:$0xff]
        %v379 = vlaneseq
        %v380 = vshrl.u32 %v379, 7
        %v381 = vsub.s32 2, %v380
        %v382 = vrot.slane %v276, %v381
        %v383 = vlaneseq
        %v384 = vshrl.u32 %v383, 7
        %v385 = vsub.s32 6, %v384
        %v386 = vrot.slane %v276, %v385
        %v389 = vlaneseq
        %v390 = vshrl.u32 %v389, 7
        %v391 = vsub.s32 2, %v390
        %v392 = vrot.slane %v382, %v391
        %v393 = vlaneseq
        %v394 = vshrl.u32 %v393, 7
        %v395 = vsub.s32 2, %v394
        %v396 = vrot.slane %v386, %v395
        %v397 = vmul.f32 %v392, %v377
        %v398 = vmul.f32 %v396, %v378
        %v399 = vadd.f32 %v374, %v397
        %v400 = vadd.f32 %v375, %v398
        %s401 = scalar_lea.vmem [#allocation7], 32
        %v402 = vld [vmem:[%s401] sm:$0xff]
        %v403 = vld [vmem:[%s401 + $0x8] sm:$0xff]
        %v404 = vlaneseq
        %v405 = vshrl.u32 %v404, 7
        %v406 = vsub.s32 2, %v405
        %v407 = vrot.slane %v277, %v406
        %v408 = vlaneseq
        %v409 = vshrl.u32 %v408, 7
        %v410 = vsub.s32 6, %v409
        %v411 = vrot.slane %v277, %v410
        %v414 = vlaneseq
        %v415 = vshrl.u32 %v414, 7
        %v416 = vsub.s32 2, %v415
        %v417 = vrot.slane %v407, %v416
        %v418 = vlaneseq
        %v419 = vshrl.u32 %v418, 7
        %v420 = vsub.s32 2, %v419
        %v421 = vrot.slane %v411, %v420
        %v422 = vmul.f32 %v417, %v402
        %v423 = vmul.f32 %v421, %v403
        %v424 = vadd.f32 %v399, %v422
        %v425 = vadd.f32 %v400, %v423
        %s426 = scalar_lea.vmem [#allocation5], 48
        %v427 = vld [vmem:[%s426] sm:$0xff]
        %v428 = vld [vmem:[%s426 + $0x8] sm:$0xff]
        %v429 = vlaneseq
        %v430 = vshrl.u32 %v429, 7
        %v431 = vsub.s32 3, %v430
        %v432 = vrot.slane %v276, %v431
        %v433 = vlaneseq
        %v434 = vshrl.u32 %v433, 7
        %v435 = vsub.s32 7, %v434
        %v436 = vrot.slane %v276, %v435
        %v439 = vlaneseq
        %v440 = vshrl.u32 %v439, 7
        %v441 = vsub.s32 3, %v440
        %v442 = vrot.slane %v432, %v441
        %v443 = vlaneseq
        %v444 = vshrl.u32 %v443, 7
        %v445 = vsub.s32 3, %v444
        %v446 = vrot.slane %v436, %v445
        %v447 = vmul.f32 %v442, %v427
        %v448 = vmul.f32 %v446, %v428
        %v449 = vadd.f32 %v424, %v447
        %v450 = vadd.f32 %v425, %v448
        %s451 = scalar_lea.vmem [#allocation7], 48
        %v452 = vld [vmem:[%s451] sm:$0xff]
        %v453 = vld [vmem:[%s451 + $0x8] sm:$0xff]
        %v454 = vlaneseq
        %v455 = vshrl.u32 %v454, 7
        %v456 = vsub.s32 3, %v455
        %v457 = vrot.slane %v277, %v456
        %v458 = vlaneseq
        %v459 = vshrl.u32 %v458, 7
        %v460 = vsub.s32 7, %v459
        %v461 = vrot.slane %v277, %v460
        %v464 = vlaneseq
        %v465 = vshrl.u32 %v464, 7
        %v466 = vsub.s32 3, %v465
        %v467 = vrot.slane %v457, %v466
        %v468 = vlaneseq
        %v469 = vshrl.u32 %v468, 7
        %v470 = vsub.s32 3, %v469
        %v471 = vrot.slane %v461, %v470
        %v472 = vmul.f32 %v467, %v452
        %v473 = vmul.f32 %v471, %v453
        %v474 = vadd.f32 %v449, %v472
        %v475 = vadd.f32 %v450, %v473
        %476 = vst [vmem:[%s266] sm:$0xff] %v474
        %477 = vst [vmem:[%s266 + $0x8] sm:$0xff] %v475
        %s478 = sand.u32 %s136, 1
        %s479 = scalar_lea.sflag [#allocation4], %s478
        %s480 = sand.u32 %s136, 1
        %s481 = smul.addr %s480, 16
        %s482 = scalar_lea.vmem [#allocation8], %s481
        // Predicated region
        $region45: #{tpu_custom_call.1} parent=31 // pred_check
          %p483 = pneg %p146
        $region46: #{tpu_custom_call.1} parent=31 // pred_check_branch
          %485 = sbr.rel (%p483) target = $region48
        $region47: #{tpu_custom_call.1} parent=31 // pred_region
          %s486 = smul.u32 2, %s27
          %s488 = ssub.s32 256, 256
          %489 = vsyncadd %s479, %s488
          %s490 = smul.addr %s26, 2
          %s491 = sadd.s32 %s486, %s490
          %s492 = smul.addr %s28, 2
          %s493 = sadd.s32 %s491, %s492
          %s494 = smul.addr %s493, 128
          %s495 = scalar_lea.hbm %s3, %s494
          %s497 = sshll.u32 %s482, 4
          %s498 = int_to_ptr.vmem [resolvable:$true] %s497
          %500 = dma.vmem_to_hbm [thread:$0]  %s498, 256, %s495, %s479
        $region48: #{tpu_custom_call.1} parent=31 // pred_fallthru
          _
      $region32: #{tpu_custom_call.1} parent=5 // pred_fallthru
        _
      %p501 = scmp.le.s32.totalorder 2, %s16
      // Predicated region
      $region49: #{tpu_custom_call.1} parent=5 // pred_check
        %p502 = pneg %p501
      $region50: #{tpu_custom_call.1} parent=5 // pred_check_branch
        %504 = sbr.rel (%p502) target = $region52
      $region51: #{tpu_custom_call.1} parent=5 // pred_region
        %s505 = ssub.s32 %s16, 2
        // Predicated region
        $region53: #{tpu_custom_call.1} parent=51 // pred_check
          %p506 = pneg %p152
        $region54: #{tpu_custom_call.1} parent=51 // pred_check_branch
          %508 = sbr.rel (%p506) target = $region56
        $region55: #{tpu_custom_call.1} parent=51 // pred_region
          %s509 = sand.u32 %s137, 1
          %s510 = scalar_lea.sflag [#allocation4], %s509
          %s511 = sand.u32 %s137, 1
          %s512 = smul.addr %s511, 16
          %s513 = scalar_lea.vmem [#allocation8], %s512
          %514 = dma.done %s510, 256
        $region56: #{tpu_custom_call.1} parent=51 // pred_fallthru
          _
      $region52: #{tpu_custom_call.1} parent=5 // pred_fallthru
        _
    $region6: #{tpu_custom_call.1} parent=1 // loop_footer
      %s20 = sadd.s32 1, %s16
    $region7: #{tpu_custom_call.1} parent=1 // loop_footer_branch
      %15 = sbr.rel target = $region3
    $region8: #{tpu_custom_call.1} parent=1 // loop_exit
      _
    %515 = vsyncpa [#allocation3], 1
    %s516 = scalar_lea.sflag [#allocation3], 1
    %517 = vsyncpa %s516, 1
    %518 = vsyncpa [#allocation6], 1
    %519 = vsyncpa [#allocation4], 1
    %s520 = scalar_lea.sflag [#allocation4], 1
    %521 = vsyncpa %s520, 1

// kernel: tpu_custom_call.1
$region0: #{tpu_custom_call.1}
  #allocation0 [shape = 'u32[]', space=smem, size = 0x4, offset = 0x4, fixed_abs, tag = 'smem constant byte address 0x4 - core index']
  #allocation1 [shape = 'u32[144,128]{1,0:T(1,128)}', space=vmem, size = 0x12000, scoped, tag = 'internal scratch']
  %s0 = inlined_call_operand.hbm [shape: f32[2,4,256], index: 0, kind: input, shape index: {}]
  %s1 = inlined_call_operand.hbm [shape: f32[4,8,256], index: 1, kind: input, shape index: {}]
  %s2 = inlined_call_operand.hbm [shape: f32[4,8,256], index: 2, kind: input, shape index: {}]
  %s3 = inlined_call_operand.hbm [shape: f32[2,8,256], index: 3, kind: output, shape index: {}]
  %s4 = sld [smem:[#allocation0]]
  $region57: #{tpu_custom_call.1} parent=0
    _
  %s6 = ssub.s32 1, %s4
  %s7 = scalar_select 0, %s6, %s4
  $region1: #{tpu_custom_call.1} parent=0
    #allocation2 [shape = 'u8[8192]{0}', space=vmem, size = 0x2000, scoped, tag = 'input window, operand 0']
    #allocation3 [shape = 's32[2]{0}', space=sflag, size = 0x8, scoped, tag = 'scoped memory for tpu_custom_call.1']
    #allocation4 [shape = 's32[2]{0}', space=sflag, size = 0x8, scoped, tag = 'scoped memory for tpu_custom_call.1']
    #allocation5 [shape = 'u8[32768]{0}', space=vmem, size = 0x8000, scoped, tag = 'input window, operand 1, single buffered']
    #allocation6 [shape = 's32[1]{0}', space=sflag, size = 0x4, scoped, tag = 'scoped memory for tpu_custom_call.1']
    #allocation7 [shape = 'u8[32768]{0}', space=vmem, size = 0x8000, scoped, tag = 'input window, operand 2, single buffered']
    #allocation8 [shape = 'u8[16384]{0}', space=vmem, size = 0x4000, scoped, tag = 'output window, operand 0']
    %8 = vsyncpa [#allocation3], 0
    %s9 = scalar_lea.sflag [#allocation3], 1
    %10 = vsyncpa %s9, 0
    %11 = vsyncpa [#allocation6], 0
    %12 = vsyncpa [#allocation4], 0
    %s13 = scalar_lea.sflag [#allocation4], 1
    %14 = vsyncpa %s13, 0
    loop: start=0, step=1, limit=4
    $region2: #{tpu_custom_call.1} parent=1 // loop_pre_header
      _
    $region3: #{tpu_custom_call.1} parent=1 // loop_header
      %s16 = sphi 0, %s20
      %p17 = scmp.ge.s32.totalorder %s16, 4
      %s23 = sphi 0, %s42
      %s24 = sphi 0, %s38
      %s25 = sphi 0, %s34
      %s26 = sphi 0, %s23
      %s27 = sphi 0, %s24
      %s28 = sphi 0, %s25
      %s29 = sphi 0, %s26
      %s30 = sphi 0, %s27
      %s31 = sphi 0, %s28
      %s47 = sphi 0, %s49
      %s50 = sphi 0, %s47
      %s51 = sphi 0, %s50
      %s67 = sphi 0, %s51
      %s75 = sphi 0, %s77
      %s78 = sphi 0, %s75
      %s79 = sphi 0, %s78
      %s95 = sphi 0, %s79
      %s103 = sphi 0, %s105
      %s106 = sphi 0, %s103
      %s107 = sphi 0, %s106
      %s123 = sphi 0, %s107
      %s133 = sphi 0, %s135
      %s136 = sphi 0, %s133
      %s137 = sphi 0, %s136
      %s153 = sphi 0, %s137
    $region4: #{tpu_custom_call.1} parent=1 // loop_header_branch
      %19 = sbr.rel (%p17) target = $region8
    $region5: #{tpu_custom_call.1} parent=1 // loop_body
      %s21 = ssub.s32 %s16, 1
      %s22 = ssub.s32 %s16, 2
      %s32 = sadd.s32 1, %s25
      %p33 = scmp.ge.s32.totalorder %s32, 2
      %s34 = scalar_select %p33, 0, %s32
      %s35 = sadd.s32 1, %s24
      %s36 = scalar_select %p33, %s35, %s24
      %p37 = scmp.ge.s32.totalorder %s36, 1
      %s38 = scalar_select %p37, 0, %s36
      %s39 = sadd.s32 1, %s23
      %s40 = scalar_select %p37, %s39, %s23
      %p41 = scmp.ge.s32.totalorder %s40, 1
      %s42 = scalar_select %p41, 0, %s40
      %s43 = ssub.s32 %s25, %s34
      %s44 = ssub.s32 %s24, %s38
      %s45 = sor.u32 %s43, %s44
      %p46 = scmp.eq.s32.totalorder %s45, 0
      %s48 = sadd.s32 %s47, 1
      %s49 = scalar_select %p46, %s47, %s48
      %p52 = pneg %p46
      %p53 = scmp.eq.s32.totalorder %s16, 1
      %p54 = por %p52, %p53
      %p55 = scmp.ne.s32.totalorder %s47, %s50
      %p56 = scmp.eq.s32.totalorder %s16, 0
      %p57 = por %p55, %p56
      %p58 = scmp.ne.s32.totalorder %s47, %s50
      %p59 = scmp.eq.s32.totalorder %s21, 1
      %p60 = por %p58, %p59
      %p61 = scmp.ne.s32.totalorder %s50, %s51
      %p62 = scmp.eq.s32.totalorder %s21, 0
      %p63 = por %p61, %p62
      %p64 = scmp.ne.s32.totalorder %s50, %s51
      %p65 = scmp.eq.s32.totalorder %s22, 1
      %p66 = por %p64, %p65
      %p68 = scmp.ne.s32.totalorder %s51, %s67
      %p69 = scmp.eq.s32.totalorder %s22, 0
      %p70 = por %p68, %p69
      %s71 = ssub.s32 %s23, %s42
      %s72 = ssub.s32 %s24, %s38
      %s73 = sor.u32 %s71, %s72
      %p74 = scmp.eq.s32.totalorder %s73, 0
      %s76 = sadd.s32 %s75, 1
      %s77 = scalar_select %p74, %s75, %s76
      %p80 = pneg %p74
      %p81 = scmp.eq.s32.totalorder %s16, 1
      %p82 = por %p80, %p81
      %p83 = scmp.ne.s32.totalorder %s75, %s78
      %p84 = scmp.eq.s32.totalorder %s16, 0
      %p85 = por %p83, %p84
      %p86 = scmp.ne.s32.totalorder %s75, %s78
      %p87 = scmp.eq.s32.totalorder %s21, 1
      %p88 = por %p86, %p87
      %p89 = scmp.ne.s32.totalorder %s78, %s79
      %p90 = scmp.eq.s32.totalorder %s21, 0
      %p91 = por %p89, %p90
      %p92 = scmp.ne.s32.totalorder %s78, %s79
      %p93 = scmp.eq.s32.totalorder %s22, 1
      %p94 = por %p92, %p93
      %p96 = scmp.ne.s32.totalorder %s79, %s95
      %p97 = scmp.eq.s32.totalorder %s22, 0
      %p98 = por %p96, %p97
      %s99 = ssub.s32 %s23, %s42
      %s100 = ssub.s32 %s24, %s38
      %s101 = sor.u32 %s99, %s100
      %p102 = scmp.eq.s32.totalorder %s101, 0
      %s104 = sadd.s32 %s103, 1
      %s105 = scalar_select %p102, %s103, %s104
      %p108 = pneg %p102
      %p109 = scmp.eq.s32.totalorder %s16, 1
      %p110 = por %p108, %p109
      %p111 = scmp.ne.s32.totalorder %s103, %s106
      %p112 = scmp.eq.s32.totalorder %s16, 0
      %p113 = por %p111, %p112
      %p114 = scmp.ne.s32.totalorder %s103, %s106
      %p115 = scmp.eq.s32.totalorder %s21, 1
      %p116 = por %p114, %p115
      %p117 = scmp.ne.s32.totalorder %s106, %s107
      %p118 = scmp.eq.s32.totalorder %s21, 0
      %p119 = por %p117, %p118
      %p120 = scmp.ne.s32.totalorder %s106, %s107
      %p121 = scmp.eq.s32.totalorder %s22, 1
      %p122 = por %p120, %p121
      %p124 = scmp.ne.s32.totalorder %s107, %s123
      %p125 = scmp.eq.s32.totalorder %s22, 0
      %p126 = por %p124, %p125
      %s127 = ssub.s32 %s25, %s34
      %s128 = ssub.s32 %s23, %s42
      %s129 = sor.u32 %s127, %s128
      %s130 = ssub.s32 %s24, %s38
      %s131 = sor.u32 %s129, %s130
      %p132 = scmp.eq.s32.totalorder %s131, 0
      %s134 = sadd.s32 %s133, 1
      %s135 = scalar_select %p132, %s133, %s134
      %p138 = pneg %p132
      %p139 = scmp.eq.s32.totalorder %s16, 1
      %p140 = por %p138, %p139
      %p141 = scmp.ne.s32.totalorder %s133, %s136
      %p142 = scmp.eq.s32.totalorder %s16, 0
      %p143 = por %p141, %p142
      %p144 = scmp.ne.s32.totalorder %s133, %s136
      %p145 = scmp.eq.s32.totalorder %s21, 1
      %p146 = por %p144, %p145
      %p147 = scmp.ne.s32.totalorder %s136, %s137
      %p148 = scmp.eq.s32.totalorder %s21, 0
      %p149 = por %p147, %p148
      %p150 = scmp.ne.s32.totalorder %s136, %s137
      %p151 = scmp.eq.s32.totalorder %s22, 1
      %p152 = por %p150, %p151
      %p154 = scmp.ne.s32.totalorder %s137, %s153
      %p155 = scmp.eq.s32.totalorder %s22, 0
      %p156 = por %p154, %p155
      %p157 = scmp.le.s32.totalorder 1, %s16
      %p158 = scmp.lt.s32.totalorder %s16, 3
      %p159 = pnand %p157, %p158
      %p160 = pneg %p159
      // Predicated region
      $region9: #{tpu_custom_call.1} parent=5 // pred_check
        _
      $region10: #{tpu_custom_call.1} parent=5 // pred_check_branch
        %162 = sbr.rel (%p159) target = $region12
      $region11: #{tpu_custom_call.1} parent=5 // pred_region
        %s163 = ssub.s32 %s16, 1
        // Predicated region
        $region13: #{tpu_custom_call.1} parent=11 // pred_check
          %p164 = pneg %p91
        $region14: #{tpu_custom_call.1} parent=11 // pred_check_branch
          %166 = sbr.rel (%p164) target = $region16
        $region15: #{tpu_custom_call.1} parent=11 // pred_region
          %s167 = smul.u32 2, %s27
          %s169 = ssub.s32 1024, 1024
          %170 = vsyncadd [#allocation6], %s169
          %s171 = smul.addr %s26, 2
          %s172 = sadd.s32 %s167, %s171
          %s173 = smul.addr %s172, 128
          %s174 = scalar_lea.hbm %s1, %s173
          %s175 = sshll.u32 [#allocation5], 4
          %s176 = int_to_ptr.vmem [resolvable:$true] %s175
          %181 = dma.hbm_to_vmem [thread:$0]  %s174, 1024, %s176, [#allocation6], 256, 256, 16
        $region16: #{tpu_custom_call.1} parent=11 // pred_fallthru
          _
        // Predicated region
        $region17: #{tpu_custom_call.1} parent=11 // pred_check
          %p182 = pneg %p119
        $region18: #{tpu_custom_call.1} parent=11 // pred_check_branch
          %184 = sbr.rel (%p182) target = $region20
        $region19: #{tpu_custom_call.1} parent=11 // pred_region
          %s185 = smul.u32 2, %s27
          %s187 = ssub.s32 1024, 1024
          %188 = vsyncadd [#allocation6], %s187
          %s189 = smul.addr %s26, 2
          %s190 = sadd.s32 %s185, %s189
          %s191 = smul.addr %s190, 128
          %s192 = scalar_lea.hbm %s2, %s191
          %s193 = sshll.u32 [#allocation7], 4
          %s194 = int_to_ptr.vmem [resolvable:$true] %s193
          %199 = dma.hbm_to_vmem [thread:$0]  %s192, 1024, %s194, [#allocation6], 256, 256, 16
        $region20: #{tpu_custom_call.1} parent=11 // pred_fallthru
          _
      $region12: #{tpu_custom_call.1} parent=5 // pred_fallthru
        _
      %p200 = scmp.lt.s32.totalorder %s16, 2
      // Predicated region
      $region21: #{tpu_custom_call.1} parent=5 // pred_check
        %p201 = pneg %p200
      $region22: #{tpu_custom_call.1} parent=5 // pred_check_branch
        %203 = sbr.rel (%p201) target = $region24
      $region23: #{tpu_custom_call.1} parent=5 // pred_region
        // Predicated region
        $region25: #{tpu_custom_call.1} parent=23 // pred_check
          %p204 = pneg %p57
        $region26: #{tpu_custom_call.1} parent=23 // pred_check_branch
          %206 = sbr.rel (%p204) target = $region28
        $region27: #{tpu_custom_call.1} parent=23 // pred_region
          %s207 = sand.u32 %s47, 1
          %s208 = scalar_lea.sflag [#allocation3], %s207
          %s209 = sand.u32 %s47, 1
          %s210 = smul.addr %s209, 8
          %s211 = scalar_lea.vmem [#allocation2], %s210
          %s212 = smul.u32 2, %s24
          %s214 = ssub.s32 128, 128
          %215 = vsyncadd %s208, %s214
          %s216 = smul.addr %s25, 2
          %s217 = sadd.s32 %s212, %s216
          %s218 = smul.addr %s217, 64
          %s219 = scalar_lea.hbm %s0, %s218
          %s221 = sshll.u32 %s211, 4
          %s222 = int_to_ptr.vmem [resolvable:$true] %s221
          %224 = dma.hbm_to_vmem [thread:$0]  %s219, 128, %s222, %s208
        $region28: #{tpu_custom_call.1} parent=23 // pred_fallthru
          _
      $region24: #{tpu_custom_call.1} parent=5 // pred_fallthru
        _
      %p225 = scmp.le.s32.totalorder 1, %s16
      %p226 = scmp.lt.s32.totalorder %s16, 3
      %p227 = pnand %p225, %p226
      %p228 = pneg %p227
      // Predicated region
      $region29: #{tpu_custom_call.1} parent=5 // pred_check
        _
      $region30: #{tpu_custom_call.1} parent=5 // pred_check_branch
        %230 = sbr.rel (%p227) target = $region32
      $region31: #{tpu_custom_call.1} parent=5 // pred_region
        %s231 = ssub.s32 %s16, 1
        %s232 = sand.u32 %s50, 1
        %s233 = scalar_lea.sflag [#allocation3], %s232
        %s234 = sand.u32 %s50, 1
        %s235 = smul.addr %s234, 8
        %s236 = scalar_lea.vmem [#allocation2], %s235
        // Predicated region
        $region33: #{tpu_custom_call.1} parent=31 // pred_check
          %p237 = pneg %p63
        $region34: #{tpu_custom_call.1} parent=31 // pred_check_branch
          %239 = sbr.rel (%p237) target = $region36
        $region35: #{tpu_custom_call.1} parent=31 // pred_region
          %240 = dma.done %s233, 128
        $region36: #{tpu_custom_call.1} parent=31 // pred_fallthru
          _
        // Predicated region
        $region37: #{tpu_custom_call.1} parent=31 // pred_check
          %p241 = pneg %p91
        $region38: #{tpu_custom_call.1} parent=31 // pred_check_branch
          %243 = sbr.rel (%p241) target = $region40
        $region39: #{tpu_custom_call.1} parent=31 // pred_region
          %244 = dma.done [#allocation6], 1024
        $region40: #{tpu_custom_call.1} parent=31 // pred_fallthru
          _
        // Predicated region
        $region41: #{tpu_custom_call.1} parent=31 // pred_check
          %p245 = pneg %p119
        $region42: #{tpu_custom_call.1} parent=31 // pred_check_branch
          %247 = sbr.rel (%p245) target = $region44
        $region43: #{tpu_custom_call.1} parent=31 // pred_region
          %248 = dma.done [#allocation6], 1024
        $region44: #{tpu_custom_call.1} parent=31 // pred_fallthru
          _
        %s249 = sand.u32 %s50, 1
        %s250 = scalar_lea.sflag [#allocation3], %s249
        %s251 = sand.u32 %s50, 1
        %s252 = smul.addr %s251, 8
        %s253 = scalar_lea.vmem [#allocation2], %s252
        %p254 = pneg %p63
        %p255 = pneg %p60
        %p256 = pneg %p91
        %p257 = pneg %p88
        %p258 = pneg %p119
        %p259 = pneg %p116
        %p260 = pneg %p149
        %p261 = pneg %p146
        %s262 = sand.u32 %s136, 1
        %s263 = scalar_lea.sflag [#allocation4], %s262
        %s264 = sand.u32 %s136, 1
        %s265 = smul.addr %s264, 16
        %s266 = scalar_lea.vmem [#allocation8], %s265
        %s267 = smul.u32 2, %s27
        %s268 = smul.u32 2, %s27
        %s269 = smul.u32 2, %s27
        %s270 = smul.u32 2, %s27
        %v271 = vld [vmem:[%s236] sm:$0xff]
        %vm272 = vcmp.ne.f32.partialorder %v271, %v271
        %vm273 = vmxor %vm272, 1
        %v274 = vsel %vm273, 1, 0
        %v275 = vcvt.s32.f32 %v274
        %v276 = vsel %vm273, %v271, 0.0
        %v277 = vsub.f32 %v275, %v276
        %v278 = vld [vmem:[#allocation5] sm:$0xff]
        %v279 = vld [vmem:[#allocation5 + $0x8] sm:$0xff]
        %v281 = vlaneseq
        %v282 = vshrl.u32 %v281, 7
        %v283 = vsub.s32 0, %v282
        %v284 = vrot.slane %v276, %v283
        %v285 = vlaneseq
        %v286 = vshrl.u32 %v285, 7
        %v287 = vsub.s32 4, %v286
        %v288 = vrot.slane %v276, %v287
        %v291 = vlaneseq
        %v292 = vshrl.u32 %v291, 7
        %v293 = vsub.s32 0, %v292
        %v294 = vrot.slane %v284, %v293
        %v295 = vlaneseq
        %v296 = vshrl.u32 %v295, 7
        %v297 = vsub.s32 0, %v296
        %v298 = vrot.slane %v288, %v297
        %v299 = vmul.f32 %v294, %v278
        %v300 = vmul.f32 %v298, %v279
        %v301 = vld [vmem:[#allocation7] sm:$0xff]
        %v302 = vld [vmem:[#allocation7 + $0x8] sm:$0xff]
        %v304 = vlaneseq
        %v305 = vshrl.u32 %v304, 7
        %v306 = vsub.s32 0, %v305
        %v307 = vrot.slane %v277, %v306
        %v308 = vlaneseq
        %v309 = vshrl.u32 %v308, 7
        %v310 = vsub.s32 4, %v309
        %v311 = vrot.slane %v277, %v310
        %v314 = vlaneseq
        %v315 = vshrl.u32 %v314, 7
        %v316 = vsub.s32 0, %v315
        %v317 = vrot.slane %v307, %v316
        %v318 = vlaneseq
        %v319 = vshrl.u32 %v318, 7
        %v320 = vsub.s32 0, %v319
        %v321 = vrot.slane %v311, %v320
        %v322 = vmul.f32 %v317, %v301
        %v323 = vmul.f32 %v321, %v302
        %v324 = vadd.f32 %v299, %v322
        %v325 = vadd.f32 %v300, %v323
        %s326 = scalar_lea.vmem [#allocation5], 16
        %v327 = vld [vmem:[%s326] sm:$0xff]
        %v328 = vld [vmem:[%s326 + $0x8] sm:$0xff]
        %v329 = vlaneseq
        %v330 = vshrl.u32 %v329, 7
        %v331 = vsub.s32 1, %v330
        %v332 = vrot.slane %v276, %v331
        %v333 = vlaneseq
        %v334 = vshrl.u32 %v333, 7
        %v335 = vsub.s32 5, %v334
        %v336 = vrot.slane %v276, %v335
        %v339 = vlaneseq
        %v340 = vshrl.u32 %v339, 7
        %v341 = vsub.s32 1, %v340
        %v342 = vrot.slane %v332, %v341
        %v343 = vlaneseq
        %v344 = vshrl.u32 %v343, 7
        %v345 = vsub.s32 1, %v344
        %v346 = vrot.slane %v336, %v345
        %v347 = vmul.f32 %v342, %v327
        %v348 = vmul.f32 %v346, %v328
        %v349 = vadd.f32 %v324, %v347
        %v350 = vadd.f32 %v325, %v348
        %s351 = scalar_lea.vmem [#allocation7], 16
        %v352 = vld [vmem:[%s351] sm:$0xff]
        %v353 = vld [vmem:[%s351 + $0x8] sm:$0xff]
        %v354 = vlaneseq
        %v355 = vshrl.u32 %v354, 7
        %v356 = vsub.s32 1, %v355
        %v357 = vrot.slane %v277, %v356
        %v358 = vlaneseq
        %v359 = vshrl.u32 %v358, 7
        %v360 = vsub.s32 5, %v359
        %v361 = vrot.slane %v277, %v360
        %v364 = vlaneseq
        %v365 = vshrl.u32 %v364, 7
        %v366 = vsub.s32 1, %v365
        %v367 = vrot.slane %v357, %v366
        %v368 = vlaneseq
        %v369 = vshrl.u32 %v368, 7
        %v370 = vsub.s32 1, %v369
        %v371 = vrot.slane %v361, %v370
        %v372 = vmul.f32 %v367, %v352
        %v373 = vmul.f32 %v371, %v353
        %v374 = vadd.f32 %v349, %v372
        %v375 = vadd.f32 %v350, %v373
        %s376 = scalar_lea.vmem [#allocation5], 32
        %v377 = vld [vmem:[%s376] sm:$0xff]
        %v378 = vld [vmem:[%s376 + $0x8] sm:$0xff]
        %v379 = vlaneseq
        %v380 = vshrl.u32 %v379, 7
        %v381 = vsub.s32 2, %v380
        %v382 = vrot.slane %v276, %v381
        %v383 = vlaneseq
        %v384 = vshrl.u32 %v383, 7
        %v385 = vsub.s32 6, %v384
        %v386 = vrot.slane %v276, %v385
        %v389 = vlaneseq
        %v390 = vshrl.u32 %v389, 7
        %v391 = vsub.s32 2, %v390
        %v392 = vrot.slane %v382, %v391
        %v393 = vlaneseq
        %v394 = vshrl.u32 %v393, 7
        %v395 = vsub.s32 2, %v394
        %v396 = vrot.slane %v386, %v395
        %v397 = vmul.f32 %v392, %v377
        %v398 = vmul.f32 %v396, %v378
        %v399 = vadd.f32 %v374, %v397
        %v400 = vadd.f32 %v375, %v398
        %s401 = scalar_lea.vmem [#allocation7], 32
        %v402 = vld [vmem:[%s401] sm:$0xff]
        %v403 = vld [vmem:[%s401 + $0x8] sm:$0xff]
        %v404 = vlaneseq
        %v405 = vshrl.u32 %v404, 7
        %v406 = vsub.s32 2, %v405
        %v407 = vrot.slane %v277, %v406
        %v408 = vlaneseq
        %v409 = vshrl.u32 %v408, 7
        %v410 = vsub.s32 6, %v409
        %v411 = vrot.slane %v277, %v410
        %v414 = vlaneseq
        %v415 = vshrl.u32 %v414, 7
        %v416 = vsub.s32 2, %v415
        %v417 = vrot.slane %v407, %v416
        %v418 = vlaneseq
        %v419 = vshrl.u32 %v418, 7
        %v420 = vsub.s32 2, %v419
        %v421 = vrot.slane %v411, %v420
        %v422 = vmul.f32 %v417, %v402
        %v423 = vmul.f32 %v421, %v403
        %v424 = vadd.f32 %v399, %v422
        %v425 = vadd.f32 %v400, %v423
        %s426 = scalar_lea.vmem [#allocation5], 48
        %v427 = vld [vmem:[%s426] sm:$0xff]
        %v428 = vld [vmem:[%s426 + $0x8] sm:$0xff]
        %v429 = vlaneseq
        %v430 = vshrl.u32 %v429, 7
        %v431 = vsub.s32 3, %v430
        %v432 = vrot.slane %v276, %v431
        %v433 = vlaneseq
        %v434 = vshrl.u32 %v433, 7
        %v435 = vsub.s32 7, %v434
        %v436 = vrot.slane %v276, %v435
        %v439 = vlaneseq
        %v440 = vshrl.u32 %v439, 7
        %v441 = vsub.s32 3, %v440
        %v442 = vrot.slane %v432, %v441
        %v443 = vlaneseq
        %v444 = vshrl.u32 %v443, 7
        %v445 = vsub.s32 3, %v444
        %v446 = vrot.slane %v436, %v445
        %v447 = vmul.f32 %v442, %v427
        %v448 = vmul.f32 %v446, %v428
        %v449 = vadd.f32 %v424, %v447
        %v450 = vadd.f32 %v425, %v448
        %s451 = scalar_lea.vmem [#allocation7], 48
        %v452 = vld [vmem:[%s451] sm:$0xff]
        %v453 = vld [vmem:[%s451 + $0x8] sm:$0xff]
        %v454 = vlaneseq
        %v455 = vshrl.u32 %v454, 7
        %v456 = vsub.s32 3, %v455
        %v457 = vrot.slane %v277, %v456
        %v458 = vlaneseq
        %v459 = vshrl.u32 %v458, 7
        %v460 = vsub.s32 7, %v459
        %v461 = vrot.slane %v277, %v460
        %v464 = vlaneseq
        %v465 = vshrl.u32 %v464, 7
        %v466 = vsub.s32 3, %v465
        %v467 = vrot.slane %v457, %v466
        %v468 = vlaneseq
        %v469 = vshrl.u32 %v468, 7
        %v470 = vsub.s32 3, %v469
        %v471 = vrot.slane %v461, %v470
        %v472 = vmul.f32 %v467, %v452
        %v473 = vmul.f32 %v471, %v453
        %v474 = vadd.f32 %v449, %v472
        %v475 = vadd.f32 %v450, %v473
        %476 = vst [vmem:[%s266] sm:$0xff] %v474
        %477 = vst [vmem:[%s266 + $0x8] sm:$0xff] %v475
        %s478 = sand.u32 %s136, 1
        %s479 = scalar_lea.sflag [#allocation4], %s478
        %s480 = sand.u32 %s136, 1
        %s481 = smul.addr %s480, 16
        %s482 = scalar_lea.vmem [#allocation8], %s481
        // Predicated region
        $region45: #{tpu_custom_call.1} parent=31 // pred_check
          %p483 = pneg %p146
        $region46: #{tpu_custom_call.1} parent=31 // pred_check_branch
          %485 = sbr.rel (%p483) target = $region48
        $region47: #{tpu_custom_call.1} parent=31 // pred_region
          %s486 = smul.u32 2, %s27
          %s488 = ssub.s32 256, 256
          %489 = vsyncadd %s479, %s488
          %s490 = smul.addr %s26, 2
          %s491 = sadd.s32 %s486, %s490
          %s492 = smul.addr %s28, 2
          %s493 = sadd.s32 %s491, %s492
          %s494 = smul.addr %s493, 128
          %s495 = scalar_lea.hbm %s3, %s494
          %s497 = sshll.u32 %s482, 4
          %s498 = int_to_ptr.vmem [resolvable:$true] %s497
          %500 = dma.vmem_to_hbm [thread:$0]  %s498, 256, %s495, %s479
        $region48: #{tpu_custom_call.1} parent=31 // pred_fallthru
          _
      $region32: #{tpu_custom_call.1} parent=5 // pred_fallthru
        _
      %p501 = scmp.le.s32.totalorder 2, %s16
      // Predicated region
      $region49: #{tpu_custom_call.1} parent=5 // pred_check
        %p502 = pneg %p501
      $region50: #{tpu_custom_call.1} parent=5 // pred_check_branch
        %504 = sbr.rel (%p502) target = $region52
      $region51: #{tpu_custom_call.1} parent=5 // pred_region
        %s505 = ssub.s32 %s16, 2
        // Predicated region
        $region53: #{tpu_custom_call.1} parent=51 // pred_check
          %p506 = pneg %p152
        $region54: #{tpu_custom_call.1} parent=51 // pred_check_branch
          %508 = sbr.rel (%p506) target = $region56
        $region55: #{tpu_custom_call.1} parent=51 // pred_region
          %s509 = sand.u32 %s137, 1
          %s510 = scalar_lea.sflag [#allocation4], %s509
          %s511 = sand.u32 %s137, 1
          %s512 = smul.addr %s511, 16
          %s513 = scalar_lea.vmem [#allocation8], %s512
          %514 = dma.done %s510, 256
        $region56: #{tpu_custom_call.1} parent=51 // pred_fallthru
          _
      $region52: #{tpu_custom_call.1} parent=5 // pred_fallthru
        _
    $region6: #{tpu_custom_call.1} parent=1 // loop_footer
      %s20 = sadd.s32 1, %s16
    $region7: #{tpu_custom_call.1} parent=1 // loop_footer_branch
      %15 = sbr.rel target = $region3
    $region8: #{tpu_custom_call.1} parent=1 // loop_exit
      _
    %515 = vsyncpa [#allocation3], 1
    %s516 = scalar_lea.sflag [#allocation3], 1
    %517 = vsyncpa %s516, 1
    %518 = vsyncpa [#allocation6], 1
    %519 = vsyncpa [#allocation4], 1
    %s520 = scalar_lea.sflag [#allocation4], 1
    %521 = vsyncpa %s520, 1

</llo_original>
